<compile_context>
chip_gen: v7x
topology: tpu7x:2x2x1
jax: 0.10.0
libtpu: 0.0.40
codegen_flags: <defaults>
</compile_context>

<pallas_src>
import functools

import jax
import jax.numpy as jnp
from jax import lax
from jax.experimental import pallas as pl
from jax.experimental.pallas import tpu as pltpu

LANE = 128                      # lane width for the fallback 2-D view
ACC_ROWS = 8                    # accumulator sublane rows (one f32 vreg stack)
VMEM_LIMIT_BYTES = 32 * 1024 * 1024


def _chip_kind():
    try:
        return jax.devices()[0].device_kind.lower()
    except Exception:
        return ""


def _bce_kernel(x_ref, y_ref, o_ref, acc_ref, *,
                tile_rows, steps_per_core, full_rows, rem, always_full):
    c = pl.program_id(0)          # partial-sum / core index ("parallel")
    s = pl.program_id(1)          # reduction step ("arbitrary")

    @pl.when(s == 0)
    def _():
        acc_ref[...] = jnp.zeros_like(acc_ref)

    x = x_ref[...].astype(jnp.float32)
    y = y_ref[...].astype(jnp.float32)
    # Numerically stable BCE-with-logits (same formulation PyTorch uses):
    #   loss = max(x, 0) - x*y + log1p(exp(-|x|))
    loss = jnp.maximum(x, 0.0) - x * y + jnp.log1p(jnp.exp(-jnp.abs(x)))

    lanes = loss.shape[-1]

    def fold(v):
        # Sublane-granule split (tile_rows % 8 == 0) -> pure vreg-wise VPU adds,
        # no relayout; keeps the live accumulator at (ACC_ROWS, lanes).
        return v.reshape(-1, ACC_ROWS, lanes).sum(axis=0)

    if always_full:
        # Every element of every tile is valid: no mask work at all.
        acc_ref[...] += fold(loss)
    else:
        b = c * steps_per_core + s                    # logical (unclamped) block index
        needs_mask = (b + 1) * tile_rows > full_rows  # block touches ragged tail / OOB?

        @pl.when(jnp.logical_not(needs_mask))
        def _():
            acc_ref[...] += fold(loss)

        @pl.when(needs_mask)
        def _():
            grow = b * tile_rows + lax.broadcasted_iota(jnp.int32, loss.shape, 0)
            lcol = lax.broadcasted_iota(jnp.int32, loss.shape, 1)
            valid = (grow < full_rows) | ((grow == full_rows) & (lcol < rem))
            acc_ref[...] += fold(jnp.where(valid, loss, 0.0))

    @pl.when(s == pl.num_programs(1) - 1)
    def _():
        # Single cross-lane/sublane reduce per core; broadcast into the
        # lane-dense (1, 8, 128) output block (wrapper reads element [c,0,0]).
        o_ref[...] = jnp.zeros_like(o_ref) + jnp.sum(acc_ref[...])


def segmentation_loss(outputs, masks, *, _tile_bytes_override=None):
    """BCEWithLogitsLoss (mean reduction), computed in a Pallas TPU kernel."""
    assert outputs.shape == masks.shape
    n = outputs.size
    assert n > 0

    kind = _chip_kind()
    is_v7 = "v7" in kind
    # v7x has 2 TensorCores/chip -> split the streaming reduce across them;
    # v5e / v6e are single-TC: keep a trivial leading axis (no phantom blocks,
    # no duplicated epilogue).
    # TODO(synk): verify in an xprof trace that the c axis actually shards
    # across v7x's two TCs; if not, switch that axis to pltpu.CORE_PARALLEL.
    num_cores = 2 if is_v7 else 1
    tile_bytes = (4 << 20) if is_v7 else (2 << 20)       # per f32 input tile
    if _tile_bytes_override is not None:
        tile_bytes = _tile_bytes_override

    # ---- Lane-dense 2-D view, avoiding a full relayout when possible -------
    last = outputs.shape[-1] if outputs.ndim >= 1 else 1
    if outputs.ndim >= 2 and last % LANE == 0:
        # Fast path: merge leading dims only; true last dim is the lane axis.
        lanes = last
        x = outputs.reshape(-1, lanes)
        y = masks.reshape(-1, lanes)
    else:
        # Fallback: flat (rows, 128) view; only the final partial lane row is
        # padded (< 128 elements) and masked out in-kernel.
        lanes = LANE
        x = outputs.reshape(-1)
        y = masks.reshape(-1)
        tail = n % LANE
        if tail:
            pad = LANE - tail
            x = jnp.pad(x, (0, pad))
            y = jnp.pad(y, (0, pad))
        x = x.reshape(-1, LANE)
        y = y.reshape(-1, LANE)

    rows = x.shape[0]
    full_rows, rem = divmod(n, lanes)

    # Sublane granule of the narrowest streamed dtype (8 f32 / 16 bf16 / 32 i8).
    ix = jnp.dtype(x.dtype).itemsize
    iy = jnp.dtype(y.dtype).itemsize
    g = max(32 // ix, 32 // iy, 8)

    # Tile sizing: big tiles amortize the ~0.35us per-step overhead; sized in
    # f32-equivalent bytes so narrower inputs just use less VMEM.
    tr_max = max(g, (tile_bytes // (lanes * 4)) // g * g)
    tile_rows = min(tr_max, -(-rows // g) * g)           # rows rounded up to granule

    nblocks = pl.cdiv(rows, tile_rows)
    nc = num_cores if nblocks >= num_cores else 1
    spc = pl.cdiv(nblocks, nc)                 # reduction steps per core
    has_phantom = nc * spc != nblocks          # uneven split -> trailing phantom step(s)
    always_full = (not has_phantom) and rem == 0 and (nblocks * tile_rows == rows)

    def in_index_map(c, s):
        b = c * spc + s
        if has_phantom:
            # Phantom steps re-read the last real block; the in-kernel mask
            # (driven by the *unclamped* index) zeroes their contribution.
            b = jnp.minimum(b, nblocks - 1)
        return (b, 0)

    kernel = functools.partial(
        _bce_kernel,
        tile_rows=tile_rows,
        steps_per_core=spc,
        full_rows=full_rows,
        rem=rem,
        always_full=always_full,
    )

    out = pl.pallas_call(
        kernel,
        out_shape=jax.ShapeDtypeStruct((nc, 8, LANE), jnp.float32),
        grid_spec=pltpu.PrefetchScalarGridSpec(
            num_scalar_prefetch=0,
            grid=(nc, spc),
            in_specs=[
                pl.BlockSpec((tile_rows, lanes), in_index_map),
                pl.BlockSpec((tile_rows, lanes), in_index_map),
            ],
            out_specs=pl.BlockSpec((1, 8, LANE), lambda c, s: (c, 0, 0)),
            scratch_shapes=[pltpu.VMEM((ACC_ROWS, lanes), jnp.float32)],
        ),
        compiler_params=pltpu.CompilerParams(
            dimension_semantics=("parallel", "arbitrary"),
            # 2 inputs x 2 buffers x (2-4 MiB) + small accumulator; explicit
            # limit keeps v5e (16 MiB default scoped) happy with big tiles and
            # stays within v7x's 64 MiB physical VMEM.
            vmem_limit_bytes=VMEM_LIMIT_BYTES,
        ),
        cost_estimate=pl.CostEstimate(
            flops=6 * n,
            transcendentals=2 * n,
            bytes_accessed=n * (ix + iy) + nc * 8 * LANE * 4,
        ),
    )(x, y)

    # Each core's partial sum lives at out[c, 0, 0] (broadcast over its block).
    return jnp.sum(out[:, 0, 0]) / n


def _ref_loss(outputs, masks):
    x = outputs.astype(jnp.float32)
    y = masks.astype(jnp.float32)
    return jnp.mean(jnp.maximum(x, 0.0) - x * y + jnp.log1p(jnp.exp(-jnp.abs(x))))


if __name__ == "__main__":
    key = jax.random.PRNGKey(0)
    k1, k2, k3, k4, k5, k6 = jax.random.split(key, 6)

    # 1) Small NCHW segmentation head (fallback lane path) + bf16 masks
    #    (half the mask HBM traffic, exact for {0,1}).
    outputs = jax.random.normal(k1, (2, 4, 16, 16), dtype=jnp.float32)
    masks = (jax.random.uniform(k2, (2, 4, 16, 16)) > 0.5).astype(jnp.bfloat16)
    loss = segmentation_loss(outputs, masks)
    jax.block_until_ready(loss)
    assert jnp.allclose(loss, _ref_loss(outputs, masks), rtol=1e-5, atol=1e-5), loss

    # 2) Last dim multiple of 128 (no-relayout fast path); tiny tile override
    #    forces a multi-step accumulation grid for coverage.
    o2 = jax.random.normal(k3, (2, 3, 16, 128), dtype=jnp.float32)
    m2 = (jax.random.uniform(k4, (2, 3, 16, 128)) > 0.5).astype(jnp.float32)
    l2 = segmentation_loss(o2, m2, _tile_bytes_override=8192)
    jax.block_until_ready(l2)
    assert jnp.allclose(l2, _ref_loss(o2, m2), rtol=1e-5, atol=1e-5), l2

    # 3) Ragged size (exercises tail-row padding + in-kernel masking).
    o3 = jax.random.normal(k5, (3, 5, 7, 11), dtype=jnp.float32)
    m3 = (jax.random.uniform(k6, (3, 5, 7, 11)) > 0.5).astype(jnp.float32)
    l3 = segmentation_loss(o3, m3, _tile_bytes_override=8192)
    jax.block_until_ready(l3)
    assert jnp.allclose(l3, _ref_loss(o3, m3), rtol=1e-5, atol=1e-5), l3

    print("KERNEL_OK")
</pallas_src>

<mosaic_0001>
module attributes {stable_mosaic.version = 11 : i64} {
  func.func @_bce_kernel(%arg0: i32, %arg1: i32, %arg2: memref<16x128xf32, #tpu.memory_space<vmem>>, %arg3: memref<16x128xbf16, #tpu.memory_space<vmem>>, %arg4: memref<1x8x128xf32, #tpu.memory_space<vmem>>, %arg5: memref<8x128xf32, #tpu.memory_space<vmem>>) attributes {dimension_semantics = [#tpu.dimension_semantics<parallel>, #tpu.dimension_semantics<arbitrary>], iteration_bounds = array<i64: 1, 1>, scalar_prefetch = 0 : i64, scratch_operands = 1 : i64, tpu.core_type = #tpu.core_type<tc>, window_params = [{transform_indices = @transform_0, window_bounds = array<i64: 16, 128>}, {transform_indices = @transform_1, window_bounds = array<i64: 16, 128>}, {transform_indices = @transform_2, window_bounds = array<i64: 1, 8, 128>}]} {
    %c0_i32 = arith.constant 0 : i32
    %0 = arith.cmpi eq, %arg1, %c0_i32 : i32
    %1 = arith.extui %0 : i1 to i32
    %c0_i32_0 = arith.constant 0 : i32
    %2 = arith.cmpi ne, %1, %c0_i32_0 : i32
    scf.if %2 {
      %cst_12 = arith.constant 0.000000e+00 : f32
      %24 = vector.broadcast %cst_12 : f32 to vector<8x128xf32>
      %c0_13 = arith.constant 0 : index
      %c0_14 = arith.constant 0 : index
      %25 = vector.load %arg5[%c0_13, %c0_14] : memref<8x128xf32, #tpu.memory_space<vmem>>, vector<8x128xf32>
      tpu.vector_store %arg5[%c0_13, %c0_14], %24 {strides = array<i32>} : memref<8x128xf32, #tpu.memory_space<vmem>>, vector<8x128xf32>,
    } else {
    }
    %c0 = arith.constant 0 : index
    %c0_1 = arith.constant 0 : index
    %3 = vector.load %arg2[%c0, %c0_1] : memref<16x128xf32, #tpu.memory_space<vmem>>, vector<16x128xf32>
    %c0_2 = arith.constant 0 : index
    %c0_3 = arith.constant 0 : index
    %4 = vector.load %arg3[%c0_2, %c0_3] : memref<16x128xbf16, #tpu.memory_space<vmem>>, vector<16x128xbf16>
    %5 = arith.extf %4 : vector<16x128xbf16> to vector<16x128xf32>
    %cst = arith.constant 0.000000e+00 : f32
    %6 = vector.broadcast %cst : f32 to vector<16x128xf32>
    %7 = arith.maximumf %3, %6 : vector<16x128xf32>
    %8 = arith.mulf %3, %5 : vector<16x128xf32>
    %9 = arith.subf %7, %8 : vector<16x128xf32>
    %10 = math.absf %3 : vector<16x128xf32>
    %cst_4 = arith.constant 0.000000e+00 : f32
    %11 = vector.broadcast %cst_4 : f32 to vector<16x128xf32>
    %12 = arith.subf %11, %10 : vector<16x128xf32>
    %13 = math.exp %12 : vector<16x128xf32>
    %14 = math.log1p %13 : vector<16x128xf32>
    %15 = arith.addf %9, %14 : vector<16x128xf32>
    %c0_5 = arith.constant 0 : index
    %c0_6 = arith.constant 0 : index
    %16 = vector.load %arg5[%c0_5, %c0_6] : memref<8x128xf32, #tpu.memory_space<vmem>>, vector<8x128xf32>
    %17 = vector.shape_cast %15 : vector<16x128xf32> to vector<2x8x128xf32>
    %cst_7 = arith.constant dense<0.000000e+00> : vector<8x128xf32>
    %18 = vector.multi_reduction <add>, %17, %cst_7 [0] : vector<2x8x128xf32> to vector<8x128xf32>
    %19 = arith.addf %16, %18 : vector<8x128xf32>
    %c0_8 = arith.constant 0 : index
    %c0_9 = arith.constant 0 : index
    %20 = vector.load %arg5[%c0_8, %c0_9] : memref<8x128xf32, #tpu.memory_space<vmem>>, vector<8x128xf32>
    tpu.vector_store %arg5[%c0_8, %c0_9], %19 {strides = array<i32>} : memref<8x128xf32, #tpu.memory_space<vmem>>, vector<8x128xf32>,
    %c0_i32_10 = arith.constant 0 : i32
    %21 = arith.cmpi eq, %arg1, %c0_i32_10 : i32
    %22 = arith.extui %21 : i1 to i32
    %c0_i32_11 = arith.constant 0 : i32
    %23 = arith.cmpi ne, %22, %c0_i32_11 : i32
    scf.if %23 {
      %cst_12 = arith.constant 0.000000e+00 : f32
      %24 = vector.broadcast %cst_12 : f32 to vector<1x8x128xf32>
      %c0_13 = arith.constant 0 : index
      %c0_14 = arith.constant 0 : index
      %25 = vector.load %arg5[%c0_13, %c0_14] : memref<8x128xf32, #tpu.memory_space<vmem>>, vector<8x128xf32>
      %26 = vector.shape_cast %25 : vector<8x128xf32> to vector<1x8x128xf32>
      %cst_15 = arith.constant dense<0.000000e+00> : vector<1xf32>
      %27 = vector.multi_reduction <add>, %26, %cst_15 [1, 2] : vector<1x8x128xf32> to vector<1xf32>
      %28 = vector.shape_cast %27 : vector<1xf32> to vector<1x1x1xf32>
      %29 = vector.extract %28[0, 0, 0] : f32 from vector<1x1x1xf32>
      %30 = vector.broadcast %29 : f32 to vector<1x8x128xf32>
      %31 = arith.addf %24, %30 : vector<1x8x128xf32>
      %c0_16 = arith.constant 0 : index
      %c0_17 = arith.constant 0 : index
      %c0_18 = arith.constant 0 : index
      %32 = vector.load %arg4[%c0_16, %c0_17, %c0_18] : memref<1x8x128xf32, #tpu.memory_space<vmem>>, vector<1x8x128xf32>
      tpu.vector_store %arg4[%c0_16, %c0_17, %c0_18], %31 {strides = array<i32>} : memref<1x8x128xf32, #tpu.memory_space<vmem>>, vector<1x8x128xf32>,
    } else {
    }
    return
  }
  func.func @transform_0(%arg0: i32, %arg1: i32) -> (i32, i32) {
    %c1_i32 = arith.constant 1 : i32
    %0 = arith.muli %arg0, %c1_i32 : i32
    %1 = arith.addi %0, %arg1 : i32
    %c0_i32 = arith.constant 0 : i32
    %c0_i32_0 = arith.constant 0 : i32
    return %1, %c0_i32 : i32, i32
  }
  func.func @transform_1(%arg0: i32, %arg1: i32) -> (i32, i32) {
    %c1_i32 = arith.constant 1 : i32
    %0 = arith.muli %arg0, %c1_i32 : i32
    %1 = arith.addi %0, %arg1 : i32
    %c0_i32 = arith.constant 0 : i32
    %c0_i32_0 = arith.constant 0 : i32
    return %1, %c0_i32 : i32, i32
  }
  func.func @transform_2(%arg0: i32, %arg1: i32) -> (i32, i32, i32) {
    %c0_i32 = arith.constant 0 : i32
    %c0_i32_0 = arith.constant 0 : i32
    %c0_i32_1 = arith.constant 0 : i32
    return %arg0, %c0_i32, %c0_i32_0 : i32, i32, i32
  }
}

</mosaic_0001>

<llo_original>
// kernel: tpu_custom_call.1
$region0: #{tpu_custom_call.1}
  #allocation0 [shape = 'u32[]', space=smem, size = 0x4, offset = 0x4, fixed_abs, tag = 'smem constant byte address 0x4 - core index']
  #allocation1 [shape = 'u32[144,128]{1,0:T(1,128)}', space=vmem, size = 0x12000, scoped, tag = 'internal scratch']
  #allocation2 [shape = 'f32[8,128]{1,0:T(8,128)}', space=vmem, size = 0x1000, scoped, tag = 'scratch operand']
  %s0 = inlined_call_operand.hbm [shape: f32[16,128], index: 0, kind: input, shape index: {}]
  %s1 = inlined_call_operand.hbm [shape: bf16[16,128], index: 1, kind: input, shape index: {}]
  %s2 = inlined_call_operand.hbm [shape: f32[1,8,128], index: 2, kind: output, shape index: {}]
  %s3 = sld [smem:[#allocation0]]
  $region34: #{tpu_custom_call.1} parent=0
    _
  %s5 = ssub.s32 1, %s3
  %s6 = scalar_select 0, %s5, %s3
  $region1: #{tpu_custom_call.1} parent=0
    #allocation3 [shape = 'u8[8192]{0}', space=vmem, size = 0x2000, scoped, tag = 'input window, operand 0, single buffered']
    #allocation4 [shape = 's32[1]{0}', space=sflag, size = 0x4, scoped, tag = 'scoped memory for tpu_custom_call.1']
    #allocation5 [shape = 's32[1]{0}', space=sflag, size = 0x4, scoped, tag = 'scoped memory for tpu_custom_call.1']
    #allocation6 [shape = 'u8[4096]{0}', space=vmem, size = 0x1000, scoped, tag = 'input window, operand 1, single buffered']
    #allocation7 [shape = 's32[1]{0}', space=sflag, size = 0x4, scoped, tag = 'scoped memory for tpu_custom_call.1']
    #allocation8 [shape = 'u8[4096]{0}', space=vmem, size = 0x1000, scoped, tag = 'output window, operand 0, single buffered']
    %7 = vsyncpa [#allocation4], 0
    %8 = vsyncpa [#allocation7], 0
    %9 = vsyncpa [#allocation5], 0
    // Predicated region
    $region2: #{tpu_custom_call.1} parent=1 // pred_check
      _
    $region3: #{tpu_custom_call.1} parent=1 // pred_check_branch
      %11 = sbr.rel (0) target = $region5
    $region4: #{tpu_custom_call.1} parent=1 // pred_region
      %s12 = sadd.s32 0, 0
      %s13 = smul.u32 2, %s12
      %s15 = ssub.s32 256, 256
      %16 = vsyncadd [#allocation4], %s15
      %s17 = smul.addr %s13, 128
      %s18 = scalar_lea.hbm %s0, %s17
      %s19 = sshll.u32 [#allocation3], 4
      %s20 = int_to_ptr.vmem [resolvable:$true] %s19
      %25 = dma.hbm_to_vmem [thread:$0]  %s18, 256, %s20, [#allocation4], 128, 128, 8
    $region5: #{tpu_custom_call.1} parent=1 // pred_fallthru
      _
    // Predicated region
    $region6: #{tpu_custom_call.1} parent=1 // pred_check
      _
    $region7: #{tpu_custom_call.1} parent=1 // pred_check_branch
      %27 = sbr.rel (0) target = $region9
    $region8: #{tpu_custom_call.1} parent=1 // pred_region
      %s28 = sadd.s32 0, 0
      %s29 = smul.u32 2, %s28
      %s31 = ssub.s32 128, 128
      %32 = vsyncadd [#allocation7], %s31
      %s33 = smul.addr %s29, 64
      %s34 = scalar_lea.hbm %s1, %s33
      %s35 = sshll.u32 [#allocation6], 4
      %s36 = int_to_ptr.vmem [resolvable:$true] %s35
      %41 = dma.hbm_to_vmem [thread:$0]  %s34, 128, %s36, [#allocation7], 64, 64, 4
    $region9: #{tpu_custom_call.1} parent=1 // pred_fallthru
      _
    // Predicated region
    $region10: #{tpu_custom_call.1} parent=1 // pred_check
      _
    $region11: #{tpu_custom_call.1} parent=1 // pred_check_branch
      %43 = sbr.rel (0) target = $region13
    $region12: #{tpu_custom_call.1} parent=1 // pred_region
      %44 = dma.done [#allocation4], 256
    $region13: #{tpu_custom_call.1} parent=1 // pred_fallthru
      _
    // Predicated region
    $region14: #{tpu_custom_call.1} parent=1 // pred_check
      _
    $region15: #{tpu_custom_call.1} parent=1 // pred_check_branch
      %46 = sbr.rel (0) target = $region17
    $region16: #{tpu_custom_call.1} parent=1 // pred_region
      %47 = dma.done [#allocation7], 128
    $region17: #{tpu_custom_call.1} parent=1 // pred_fallthru
      _
    %s48 = sadd.s32 0, 0
    %s49 = smul.u32 2, %s48
    %s50 = sadd.s32 0, 0
    %s51 = smul.u32 2, %s50
    %p52 = scmp.eq.s32.totalorder 0, 0
    // Predicated region
    $region18: #{tpu_custom_call.1} parent=1 // pred_check
      %p53 = pneg %p52
    $region19: #{tpu_custom_call.1} parent=1 // pred_check_branch
      %55 = sbr.rel (%p53) target = $region21
    $region20: #{tpu_custom_call.1} parent=1 // pred_region
      %56 = vst [vmem:[#allocation2] sm:$0xff] 0.0
    $region21: #{tpu_custom_call.1} parent=1 // pred_fallthru
      _
    %v57 = vld [vmem:[#allocation3] sm:$0xff]
    %v58 = vld [vmem:[#allocation3 + $0x8] sm:$0xff]
    %v59 = vld [vmem:[#allocation6] sm:$0xf]
    %v60 = vld [vmem:[#allocation6 + $0x4] sm:$0xf]
    %v61 = vunpack.c.l.bf16 %v59
    %v62 = vunpack.c.l.bf16 %v60
    %v63 = vmax.f32 %v57, 0.0
    %v64 = vmax.f32 %v58, 0.0
    %v65 = vmul.f32 %v57, %v61
    %v66 = vmul.f32 %v58, %v62
    %v67 = vsub.f32 %v63, %v65
    %v68 = vsub.f32 %v64, %v66
    %v69 = vand.u32 2147483647, %v57
    %v70 = vand.u32 2147483647, %v58
    %v71 = vsub.f32 0.0, %v69
    %v72 = vsub.f32 0.0, %v70
    %v73 = vmul.f32 %v71, 1.442695
    %v74 = vpow.pop %v73
    %v75 = vmul.f32 %v72, 1.442695
    %v76 = vpow.pop %v75
    %v77 = vadd.f32 %v74, 1.0
    %v78 = vlog2.pop %v77
    %v79 = vmul.f32 %v78, 0.6931472
    %v80 = vmul.f32 -0.5, %v74
    %v81 = vadd.f32 %v80, 1.0
    %v82 = vmul.f32 %v81, %v74
    %v83 = vand.u32 2147483647, %v74
    %vm84 = vcmp.lt.f32.partialorder %v83, 0.0004427343
    %v85 = vsel %vm84, %v82, %v79
    %v86 = vadd.f32 %v76, 1.0
    %v87 = vlog2.pop %v86
    %v88 = vmul.f32 %v87, 0.6931472
    %v89 = vmul.f32 -0.5, %v76
    %v90 = vadd.f32 %v89, 1.0
    %v91 = vmul.f32 %v90, %v76
    %v92 = vand.u32 2147483647, %v76
    %vm93 = vcmp.lt.f32.partialorder %v92, 0.0004427343
    %v94 = vsel %vm93, %v91, %v88
    %v95 = vadd.f32 %v67, %v85
    %v96 = vadd.f32 %v68, %v94
    %v97 = vld [vmem:[#allocation2] sm:$0xff]
    %v98 = vadd.f32 %v95, %v96
    %v99 = vadd.f32 %v97, %v98
    %100 = vst [vmem:[#allocation2] sm:$0xff] %v99
    // Predicated region
    $region22: #{tpu_custom_call.1} parent=1 // pred_check
      %p101 = pneg %p52
    $region23: #{tpu_custom_call.1} parent=1 // pred_check_branch
      %103 = sbr.rel (%p101) target = $region25
    $region24: #{tpu_custom_call.1} parent=1 // pred_region
      %v104 = vld [vmem:[#allocation2] sm:$0xff]
      %105 = vadd.xlane.f32.xlu0 %v104
      %v106 = vpop.xlane.xlu0 %105
      %v107 = vrot.slane %v106, 4
      %v108 = vadd.f32 %v106, %v107
      %v109 = vrot.slane %v108, 2
      %v110 = vadd.f32 %v108, %v109
      %v111 = vrot.slane %v110, 1
      %v112 = vadd.f32 %v110, %v111
      %s113 = vtos %v112
      %v114 = vstv %s113
      %v115 = vadd.f32 %v114, 0.0
      %116 = vst [vmem:[#allocation8] sm:$0xff] %v115
    $region25: #{tpu_custom_call.1} parent=1 // pred_fallthru
      _
    // Predicated region
    $region26: #{tpu_custom_call.1} parent=1 // pred_check
      _
    $region27: #{tpu_custom_call.1} parent=1 // pred_check_branch
      %118 = sbr.rel (0) target = $region29
    $region28: #{tpu_custom_call.1} parent=1 // pred_region
      %s120 = ssub.s32 128, 128
      %121 = vsyncadd [#allocation5], %s120
      %s123 = sshll.u32 [#allocation8], 4
      %s124 = int_to_ptr.vmem [resolvable:$true] %s123
      %126 = dma.vmem_to_hbm [thread:$0]  %s124, 128, %s2, [#allocation5]
    $region29: #{tpu_custom_call.1} parent=1 // pred_fallthru
      _
    // Predicated region
    $region30: #{tpu_custom_call.1} parent=1 // pred_check
      _
    $region31: #{tpu_custom_call.1} parent=1 // pred_check_branch
      %128 = sbr.rel (0) target = $region33
    $region32: #{tpu_custom_call.1} parent=1 // pred_region
      %129 = dma.done [#allocation5], 128
    $region33: #{tpu_custom_call.1} parent=1 // pred_fallthru
      _
    %130 = vsyncpa [#allocation4], 1
    %131 = vsyncpa [#allocation7], 1
    %132 = vsyncpa [#allocation5], 1

</llo_original>
